<compile_context>
chip_gen: v6e
topology: v6e:2x2x1
jax: 0.10.0
libtpu: 0.0.40
codegen_flags: <defaults>
</compile_context>

<pallas_src>
import jax
import jax.numpy as jnp
from jax.experimental import pallas as pl
from jax.experimental.pallas import tpu as pltpu


def _qnet_kernel(x_ref, w1_ref, w2_ref, wo_ref, b1_ref, b2_ref, bo_ref, o_ref):
    """Fused 2-hidden-layer MLP critic, feature-major:
       o = Wo @ relu(W2 @ relu(W1 @ x + b1) + b2) + bo, x = [state; action]^T."""
    x = x_ref[...]                                                 # (in_dim, tb)

    h = jnp.dot(w1_ref[...], x, preferred_element_type=jnp.float32)
    h = jnp.maximum(h + b1_ref[...], 0.0)                          # (h1, tb)

    h = jnp.dot(w2_ref[...], h, preferred_element_type=jnp.float32)
    h = jnp.maximum(h + b2_ref[...], 0.0)                          # (h2, tb)

    out = jnp.dot(wo_ref[...], h, preferred_element_type=jnp.float32)
    out = out + bo_ref[...]                                        # (out, tb)
    o_ref[...] = out.astype(o_ref.dtype)                           # lane-dense


def _xavier_uniform(key, fan_out, fan_in, dtype=jnp.float32):
    bound = (6.0 / (fan_in + fan_out)) ** 0.5
    # Stored (out, in) -- same layout and distribution as torch's xavier init.
    return jax.random.uniform(key, (fan_out, fan_in), dtype, -bound, bound)


def init_qnetwork_params(key, state_dim, action_dim, hidden_sizes, output_size):
    assert len(hidden_sizes) == 2, "fused kernel is written for 2 hidden layers"
    h1, h2 = hidden_sizes
    in_dim = state_dim + action_dim
    k1, k2, k3 = jax.random.split(key, 3)
    return {
        # Weights as (out_features, in_features), like torch.nn.Linear.weight.
        "w1": _xavier_uniform(k1, h1, in_dim),
        "w2": _xavier_uniform(k2, h2, h1),
        "wo": _xavier_uniform(k3, output_size, h2),
        # Biases as (features, 1) columns (broadcast along the batch lanes),
        # constant 0.1 to match weights_init_.
        "b1": jnp.full((h1, 1), 0.1, jnp.float32),
        "b2": jnp.full((h2, 1), 0.1, jnp.float32),
        "bo": jnp.full((output_size, 1), 0.1, jnp.float32),
    }


def _pick_batch_tile(batch):
    # Small batches: a single full block (block == full dim sidesteps the
    # 128-lane divisibility rule). Larger batches: >= 2 lane-aligned tiles so
    # the "parallel" batch axis can shard across v7x's 2 TensorCores, capped
    # at 2048 lanes -- the double-buffered per-tile VMEM footprint (~a few
    # hundred KiB) is far under the default scoped limit on all chips.
    if batch < 512:
        return batch
    half = (batch + 1) // 2
    tb = ((half + 127) // 128) * 128
    return min(tb, 2048)


@jax.jit
def qnetwork_forward(state, action, params):
    state = state.astype(jnp.float32)
    action = action.astype(jnp.float32)
    batch, state_dim = state.shape
    action_dim = action.shape[1]
    in_dim = state_dim + action_dim
    h1 = params["w1"].shape[0]
    h2 = params["w2"].shape[0]
    out_size = params["wo"].shape[0]

    # Layout plumbing (fused by XLA into one copy): concat + transpose so the
    # kernel sees the batch on the lane axis.
    x_t = jnp.concatenate([state, action], axis=1).T               # (in_dim, batch)

    tb = _pick_batch_tile(batch)
    grid = (pl.cdiv(batch, tb),)

    x_spec = pl.BlockSpec((in_dim, tb), lambda i: (0, i))
    out_spec = pl.BlockSpec((out_size, tb), lambda i: (0, i))
    const_spec = lambda arr: pl.BlockSpec(arr.shape, lambda i: (0, 0))

    param_elems = sum(int(p.size) for p in params.values())
    flops = 2 * batch * (in_dim * h1 + h1 * h2 + h2 * out_size)
    bytes_accessed = 4 * (batch * (in_dim + out_size) + param_elems)

    out_t = pl.pallas_call(
        _qnet_kernel,
        out_shape=jax.ShapeDtypeStruct((out_size, batch), jnp.float32),
        grid=grid,
        in_specs=[
            x_spec,                        # (in_dim, tb) activation tile
            const_spec(params["w1"]),      # VMEM-resident params
            const_spec(params["w2"]),
            const_spec(params["wo"]),
            const_spec(params["b1"]),
            const_spec(params["b2"]),
            const_spec(params["bo"]),
        ],
        out_specs=out_spec,
        compiler_params=pltpu.CompilerParams(
            dimension_semantics=("parallel",)),
        cost_estimate=pl.CostEstimate(
            flops=flops, transcendentals=0, bytes_accessed=bytes_accessed),
    )(
        x_t,
        params["w1"], params["w2"], params["wo"],
        params["b1"], params["b2"], params["bo"],
    )
    # (out_size, batch) -> (batch, out_size) to match the PyTorch module.
    return out_t.T


def _reference_forward(state, action, params):
    x = jnp.concatenate([state, action], axis=1)
    h = jnp.maximum(x @ params["w1"].T + params["b1"].T, 0.0)
    h = jnp.maximum(h @ params["w2"].T + params["b2"].T, 0.0)
    return h @ params["wo"].T + params["bo"].T


if __name__ == "__main__":
    # Small shapes consistent with a SAC critic: Q(state, action) -> scalar.
    state_dim = 12
    action_dim = 4
    hidden_sizes = (32, 32)
    output_size = 1

    key = jax.random.PRNGKey(0)
    k_params, k_state, k_action = jax.random.split(key, 3)
    params = init_qnetwork_params(k_params, state_dim, action_dim,
                                  hidden_sizes, output_size)

    # 1) Tiny batch (single full block).
    batch = 2
    state = jax.random.normal(k_state, (batch, state_dim), jnp.float32)
    action = jax.random.normal(k_action, (batch, action_dim), jnp.float32)
    q = qnetwork_forward(state, action, params)
    jax.block_until_ready(q)
    q_ref = _reference_forward(state, action, params)
    assert q.shape == (batch, output_size)
    assert jnp.allclose(q, q_ref, atol=1e-5, rtol=1e-5), (q, q_ref)

    # 2) Larger batch exercising the multi-tile "parallel" grid path
    #    (grid=(2,), partial second block, 2-TensorCore sharding on v7x).
    big = 1000
    ks, ka = jax.random.split(jax.random.PRNGKey(1))
    state_b = jax.random.normal(ks, (big, state_dim), jnp.float32)
    action_b = jax.random.normal(ka, (big, action_dim), jnp.float32)
    q_b = qnetwork_forward(state_b, action_b, params)
    jax.block_until_ready(q_b)
    q_b_ref = _reference_forward(state_b, action_b, params)
    assert q_b.shape == (big, output_size)
    assert jnp.allclose(q_b, q_b_ref, atol=1e-4, rtol=1e-4)

    print("KERNEL_OK")
</pallas_src>

<mosaic_0001>
module attributes {stable_mosaic.version = 11 : i64} {
  func.func @_qnet_kernel(%arg0: i32, %arg1: memref<16x2xf32, #tpu.memory_space<vmem>>, %arg2: memref<32x16xf32, #tpu.memory_space<vmem>>, %arg3: memref<32x32xf32, #tpu.memory_space<vmem>>, %arg4: memref<1x32xf32, #tpu.memory_space<vmem>>, %arg5: memref<32x1xf32, #tpu.memory_space<vmem>>, %arg6: memref<32x1xf32, #tpu.memory_space<vmem>>, %arg7: memref<1x1xf32, #tpu.memory_space<vmem>>, %arg8: memref<1x2xf32, #tpu.memory_space<vmem>>) attributes {dimension_semantics = [#tpu.dimension_semantics<parallel>], iteration_bounds = array<i64: 1>, scalar_prefetch = 0 : i64, scratch_operands = 0 : i64, tpu.core_type = #tpu.core_type<tc>, window_params = [{transform_indices = @transform_0, window_bounds = array<i64: 16, 2>}, {pipeline_mode = #tpu.pipeline_mode<synchronous>, transform_indices = @transform_1, window_bounds = array<i64: 32, 16>}, {pipeline_mode = #tpu.pipeline_mode<synchronous>, transform_indices = @transform_2, window_bounds = array<i64: 32, 32>}, {pipeline_mode = #tpu.pipeline_mode<synchronous>, transform_indices = @transform_3, window_bounds = array<i64: 1, 32>}, {pipeline_mode = #tpu.pipeline_mode<synchronous>, transform_indices = @transform_4, window_bounds = array<i64: 32, 1>}, {pipeline_mode = #tpu.pipeline_mode<synchronous>, transform_indices = @transform_5, window_bounds = array<i64: 32, 1>}, {pipeline_mode = #tpu.pipeline_mode<synchronous>, transform_indices = @transform_6, window_bounds = array<i64: 1, 1>}, {transform_indices = @transform_7, window_bounds = array<i64: 1, 2>}]} {
    %c0 = arith.constant 0 : index
    %c0_0 = arith.constant 0 : index
    %0 = vector.load %arg1[%c0, %c0_0] : memref<16x2xf32, #tpu.memory_space<vmem>>, vector<16x2xf32>
    %c0_1 = arith.constant 0 : index
    %c0_2 = arith.constant 0 : index
    %1 = vector.load %arg2[%c0_1, %c0_2] : memref<32x16xf32, #tpu.memory_space<vmem>>, vector<32x16xf32>
    %cst = arith.constant dense<0.000000e+00> : vector<32x2xf32>
    %2 = tpu.matmul %1, %0, %cst {dimension_numbers = #tpu.dot_dimension_numbers<[1], [0], [0], [1], [0, 0, 1, 1], [], []>} : vector<32x16xf32>, vector<16x2xf32>, vector<32x2xf32> -> vector<32x2xf32>
    %c0_3 = arith.constant 0 : index
    %c0_4 = arith.constant 0 : index
    %3 = vector.load %arg5[%c0_3, %c0_4] : memref<32x1xf32, #tpu.memory_space<vmem>>, vector<32x1xf32>
    %4 = vector.broadcast %3 : vector<32x1xf32> to vector<32x2xf32>
    %5 = arith.addf %2, %4 : vector<32x2xf32>
    %cst_5 = arith.constant 0.000000e+00 : f32
    %6 = vector.broadcast %cst_5 : f32 to vector<32x2xf32>
    %7 = arith.maximumf %5, %6 : vector<32x2xf32>
    %c0_6 = arith.constant 0 : index
    %c0_7 = arith.constant 0 : index
    %8 = vector.load %arg3[%c0_6, %c0_7] : memref<32x32xf32, #tpu.memory_space<vmem>>, vector<32x32xf32>
    %cst_8 = arith.constant dense<0.000000e+00> : vector<32x2xf32>
    %9 = tpu.matmul %8, %7, %cst_8 {dimension_numbers = #tpu.dot_dimension_numbers<[1], [0], [0], [1], [0, 0, 1, 1], [], []>} : vector<32x32xf32>, vector<32x2xf32>, vector<32x2xf32> -> vector<32x2xf32>
    %c0_9 = arith.constant 0 : index
    %c0_10 = arith.constant 0 : index
    %10 = vector.load %arg6[%c0_9, %c0_10] : memref<32x1xf32, #tpu.memory_space<vmem>>, vector<32x1xf32>
    %11 = vector.broadcast %10 : vector<32x1xf32> to vector<32x2xf32>
    %12 = arith.addf %9, %11 : vector<32x2xf32>
    %cst_11 = arith.constant 0.000000e+00 : f32
    %13 = vector.broadcast %cst_11 : f32 to vector<32x2xf32>
    %14 = arith.maximumf %12, %13 : vector<32x2xf32>
    %c0_12 = arith.constant 0 : index
    %c0_13 = arith.constant 0 : index
    %15 = vector.load %arg4[%c0_12, %c0_13] : memref<1x32xf32, #tpu.memory_space<vmem>>, vector<1x32xf32>
    %cst_14 = arith.constant dense<0.000000e+00> : vector<1x2xf32>
    %16 = tpu.matmul %15, %14, %cst_14 {dimension_numbers = #tpu.dot_dimension_numbers<[1], [0], [0], [1], [0, 0, 1, 1], [], []>} : vector<1x32xf32>, vector<32x2xf32>, vector<1x2xf32> -> vector<1x2xf32>
    %c0_15 = arith.constant 0 : index
    %c0_16 = arith.constant 0 : index
    %17 = vector.load %arg7[%c0_15, %c0_16] : memref<1x1xf32, #tpu.memory_space<vmem>>, vector<1x1xf32>
    %18 = vector.broadcast %17 : vector<1x1xf32> to vector<1x2xf32>
    %19 = arith.addf %16, %18 : vector<1x2xf32>
    %c0_17 = arith.constant 0 : index
    %c0_18 = arith.constant 0 : index
    %20 = vector.load %arg8[%c0_17, %c0_18] : memref<1x2xf32, #tpu.memory_space<vmem>>, vector<1x2xf32>
    tpu.vector_store %arg8[%c0_17, %c0_18], %19 {strides = array<i32>} : memref<1x2xf32, #tpu.memory_space<vmem>>, vector<1x2xf32>,
    return
  }
  func.func @transform_0(%arg0: i32) -> (i32, i32) {
    %c0_i32 = arith.constant 0 : i32
    %c0_i32_0 = arith.constant 0 : i32
    return %c0_i32, %arg0 : i32, i32
  }
  func.func @transform_1(%arg0: i32) -> (i32, i32) {
    %c0_i32 = arith.constant 0 : i32
    %c0_i32_0 = arith.constant 0 : i32
    %c0_i32_1 = arith.constant 0 : i32
    return %c0_i32, %c0_i32_0 : i32, i32
  }
  func.func @transform_2(%arg0: i32) -> (i32, i32) {
    %c0_i32 = arith.constant 0 : i32
    %c0_i32_0 = arith.constant 0 : i32
    %c0_i32_1 = arith.constant 0 : i32
    return %c0_i32, %c0_i32_0 : i32, i32
  }
  func.func @transform_3(%arg0: i32) -> (i32, i32) {
    %c0_i32 = arith.constant 0 : i32
    %c0_i32_0 = arith.constant 0 : i32
    %c0_i32_1 = arith.constant 0 : i32
    return %c0_i32, %c0_i32_0 : i32, i32
  }
  func.func @transform_4(%arg0: i32) -> (i32, i32) {
    %c0_i32 = arith.constant 0 : i32
    %c0_i32_0 = arith.constant 0 : i32
    %c0_i32_1 = arith.constant 0 : i32
    return %c0_i32, %c0_i32_0 : i32, i32
  }
  func.func @transform_5(%arg0: i32) -> (i32, i32) {
    %c0_i32 = arith.constant 0 : i32
    %c0_i32_0 = arith.constant 0 : i32
    %c0_i32_1 = arith.constant 0 : i32
    return %c0_i32, %c0_i32_0 : i32, i32
  }
  func.func @transform_6(%arg0: i32) -> (i32, i32) {
    %c0_i32 = arith.constant 0 : i32
    %c0_i32_0 = arith.constant 0 : i32
    %c0_i32_1 = arith.constant 0 : i32
    return %c0_i32, %c0_i32_0 : i32, i32
  }
  func.func @transform_7(%arg0: i32) -> (i32, i32) {
    %c0_i32 = arith.constant 0 : i32
    %c0_i32_0 = arith.constant 0 : i32
    return %c0_i32, %arg0 : i32, i32
  }
}

</mosaic_0001>

<llo_original>
// kernel: qnetwork_forward.1
$region0: #{qnetwork_forward.1}
  #allocation0 [shape = 'u32[]', space=smem, size = 0x4, offset = 0x4, fixed_abs, tag = 'smem constant byte address 0x4 - core index']
  #allocation1 [shape = 'u32[144,128]{1,0:T(1,128)}', space=vmem, size = 0x12000, scoped, tag = 'internal scratch']
  #allocation2 [shape = 'f32[1,1]{1,0:T(1,128)S(1)}', space=vmem, size = 0x200, scoped, tag = 'scoped memory for qnetwork_forward.1']
  %s0 = inlined_call_operand.vmem [shape: f32[16,2], index: 0, kind: input, shape index: {}]
  %s1 = inlined_call_operand.vmem [shape: f32[32,16], index: 1, kind: input, shape index: {}]
  %s2 = inlined_call_operand.vmem [shape: f32[32,32], index: 2, kind: input, shape index: {}]
  %s3 = inlined_call_operand.vmem [shape: f32[1,32], index: 3, kind: input, shape index: {}]
  %s4 = inlined_call_operand.vmem [shape: f32[32,1], index: 4, kind: input, shape index: {}]
  %s5 = inlined_call_operand.vmem [shape: f32[32,1], index: 5, kind: input, shape index: {}]
  %s6 = inlined_call_operand.<no memory space> [shape: f32[1,1], index: 6, kind: input, shape index: {}]
  %s7 = inlined_call_operand.hbm [shape: f32[1,2], index: 7, kind: output, shape index: {}]
  %s8 = sld [smem:[#allocation0]]
  $region38: #{qnetwork_forward.1} parent=0
    _
  %s10 = ssub.s32 1, %s8
  %s11 = scalar_select 0, %s10, %s8
  %v12 = vstv %s6
  %13 = vst [vmem:[#allocation2] sm:$0x1] %v12
  $region1: #{qnetwork_forward.1} parent=0
    #allocation3 [shape = 'u8[512]{0}', space=vmem, size = 0x400, scoped, tag = 'output window, operand 0, single buffered']
    #allocation4 [shape = 's32[1]{0}', space=sflag, size = 0x4, scoped, tag = 'scoped memory for qnetwork_forward.1']
    %14 = vsyncpa [#allocation4], 0
    // Predicated region
    $region2: #{qnetwork_forward.1} parent=1 // pred_check
      _
    $region3: #{qnetwork_forward.1} parent=1 // pred_check_branch
      %16 = sbr.rel (0) target = $region5
    $region4: #{qnetwork_forward.1} parent=1 // pred_region
      _
    $region5: #{qnetwork_forward.1} parent=1 // pred_fallthru
      _
    // Predicated region
    $region6: #{qnetwork_forward.1} parent=1 // pred_check
      _
    $region7: #{qnetwork_forward.1} parent=1 // pred_check_branch
      %18 = sbr.rel (0) target = $region9
    $region8: #{qnetwork_forward.1} parent=1 // pred_region
      _
    $region9: #{qnetwork_forward.1} parent=1 // pred_fallthru
      _
    // Predicated region
    $region10: #{qnetwork_forward.1} parent=1 // pred_check
      _
    $region11: #{qnetwork_forward.1} parent=1 // pred_check_branch
      %20 = sbr.rel (0) target = $region13
    $region12: #{qnetwork_forward.1} parent=1 // pred_region
      _
    $region13: #{qnetwork_forward.1} parent=1 // pred_fallthru
      _
    // Predicated region
    $region14: #{qnetwork_forward.1} parent=1 // pred_check
      _
    $region15: #{qnetwork_forward.1} parent=1 // pred_check_branch
      %22 = sbr.rel (0) target = $region17
    $region16: #{qnetwork_forward.1} parent=1 // pred_region
      _
    $region17: #{qnetwork_forward.1} parent=1 // pred_fallthru
      _
    // Predicated region
    $region18: #{qnetwork_forward.1} parent=1 // pred_check
      _
    $region19: #{qnetwork_forward.1} parent=1 // pred_check_branch
      %24 = sbr.rel (0) target = $region21
    $region20: #{qnetwork_forward.1} parent=1 // pred_region
      _
    $region21: #{qnetwork_forward.1} parent=1 // pred_fallthru
      _
    // Predicated region
    $region22: #{qnetwork_forward.1} parent=1 // pred_check
      _
    $region23: #{qnetwork_forward.1} parent=1 // pred_check_branch
      %26 = sbr.rel (0) target = $region25
    $region24: #{qnetwork_forward.1} parent=1 // pred_region
      _
    $region25: #{qnetwork_forward.1} parent=1 // pred_fallthru
      _
    // Predicated region
    $region26: #{qnetwork_forward.1} parent=1 // pred_check
      _
    $region27: #{qnetwork_forward.1} parent=1 // pred_check_branch
      %28 = sbr.rel (0) target = $region29
    $region28: #{qnetwork_forward.1} parent=1 // pred_region
      _
    $region29: #{qnetwork_forward.1} parent=1 // pred_fallthru
      _
    %v29 = vld [vmem:[%s0] sm:$0xff]
    %v30 = vld [vmem:[%s0 + $0x8] sm:$0xff]
    %v31 = vld [vmem:[%s1] sm:$0xff]
    %v32 = vld [vmem:[%s1 + $0x8] sm:$0xff]
    %v33 = vld [vmem:[%s1 + $0x10] sm:$0xff]
    %v34 = vld [vmem:[%s1 + $0x18] sm:$0xff]
    %v35 = vld [vmem:[%s4] sm:$0xff]
    %v36 = vld [vmem:[%s4 + $0x8] sm:$0xff]
    %v37 = vld [vmem:[%s4 + $0x10] sm:$0xff]
    %v38 = vld [vmem:[%s4 + $0x18] sm:$0xff]
    %40 = vset.pattern.permute.xlu0 0
    %41 = vperm.xlu0 %40, %v35
    %v42 = vpop.permute.xlu0 %41
    %45 = vset.pattern.permute.xlu0 0
    %46 = vperm.xlu0 %45, %v36
    %v47 = vpop.permute.xlu0 %46
    %50 = vset.pattern.permute.xlu0 0
    %51 = vperm.xlu0 %50, %v37
    %v52 = vpop.permute.xlu0 %51
    %55 = vset.pattern.permute.xlu0 0
    %56 = vperm.xlu0 %55, %v38
    %v57 = vpop.permute.xlu0 %56
    %vm59 = vcmask 130048
    %v61 = vsel %vm59, %v31, 0
    %v64 = vsel %vm59, %v32, 0
    %v67 = vsel %vm59, %v33, 0
    %v70 = vsel %vm59, %v34, 0
    %72 = vmatprep.subr.mxu0 0.0
    %73 = vmatpush1.msra.mxu0 0.0
    %74 = vmatprep.subr.mxu0 0.0
    %75 = vmatpush1.msra.mxu0 0.0
    %76 = vmatprep.subr.mxu0 0.0
    %77 = vmatpush1.msra.mxu0 0.0
    %78 = vmatprep.subr.mxu0 0.0
    %79 = vmatpush1.msra.mxu0 0.0
    %80 = vmatprep.subr.mxu0 0.0
    %81 = vmatpush1.msra.mxu0 0.0
    %82 = vmatprep.subr.mxu0 0.0
    %83 = vmatpush1.msra.mxu0 0.0
    %84 = vmatprep.subr.mxu0 0.0
    %85 = vmatpush1.msra.mxu0 0.0
    %86 = vmatprep.subr.mxu0 0.0
    %87 = vmatpush1.msra.mxu0 0.0
    %88 = vmatprep.subr.mxu0 0.0
    %89 = vmatpush1.msra.mxu0 0.0
    %90 = vmatprep.subr.mxu0 0.0
    %91 = vmatpush1.msra.mxu0 0.0
    %92 = vmatprep.subr.mxu0 0.0
    %93 = vmatpush1.msra.mxu0 0.0
    %94 = vmatprep.subr.mxu0 0.0
    %95 = vmatpush1.msra.mxu0 0.0
    %96 = vmatprep.subr.mxu0 0.0
    %97 = vmatpush1.msra.mxu0 0.0
    %98 = vmatprep.subr.mxu0 0.0
    %99 = vmatpush1.msra.mxu0 0.0
    %100 = vmatprep.subr.mxu0 0.0
    %101 = vmatpush1.msra.mxu0 %v30
    %102 = vmatprep.subr.mxu0 0.0
    %103 = vmatpush1.msra.mxu0 %v29
    %104 = vmatprep.subr.mxu0 0.0
    %105 = vmatpush2.msra.mxu0 0.0
    %106 = vmatprep.subr.mxu0 0.0
    %107 = vmatpush2.msra.mxu0 0.0
    %108 = vmatprep.subr.mxu0 0.0
    %109 = vmatpush2.msra.mxu0 0.0
    %110 = vmatprep.subr.mxu0 0.0
    %111 = vmatpush2.msra.mxu0 0.0
    %112 = vmatprep.subr.mxu0 0.0
    %113 = vmatpush2.msra.mxu0 0.0
    %114 = vmatprep.subr.mxu0 0.0
    %115 = vmatpush2.msra.mxu0 0.0
    %116 = vmatprep.subr.mxu0 0.0
    %117 = vmatpush2.msra.mxu0 0.0
    %118 = vmatprep.subr.mxu0 0.0
    %119 = vmatpush2.msra.mxu0 0.0
    %120 = vmatprep.subr.mxu0 0.0
    %121 = vmatpush2.msra.mxu0 0.0
    %122 = vmatprep.subr.mxu0 0.0
    %123 = vmatpush2.msra.mxu0 0.0
    %124 = vmatprep.subr.mxu0 0.0
    %125 = vmatpush2.msra.mxu0 0.0
    %126 = vmatprep.subr.mxu0 0.0
    %127 = vmatpush2.msra.mxu0 0.0
    %128 = vmatprep.subr.mxu0 0.0
    %129 = vmatpush2.msra.mxu0 0.0
    %130 = vmatprep.subr.mxu0 0.0
    %131 = vmatpush2.msra.mxu0 0.0
    %132 = vmatprep.subr.mxu0 0.0
    %133 = vmatpush2.msra.mxu0 0.0
    %134 = vmatprep.subr.mxu0 0.0
    %135 = vmatpush2.msra.mxu0 0.0
    %136 = vmatprep.mubr.f32.mxu0 0.0
    %137 = vmatmul.mubr.f32.gmra.mxu0 %v61
    %v138 = vpop.f32.mrf.mxu0
    %v139 = vadd.f32 %v42, %v138
    %v140 = vpop.f32.mrf.mxu0
    %141 = vmatprep.mubr.f32.mxu0 0.0
    %142 = vmatmul.mubr.f32.gmra.mxu0 %v64
    %v143 = vpop.f32.mrf.mxu0
    %v144 = vadd.f32 %v47, %v143
    %v145 = vpop.f32.mrf.mxu0
    %146 = vmatprep.mubr.f32.mxu0 0.0
    %147 = vmatmul.mubr.f32.gmra.mxu0 %v67
    %v148 = vpop.f32.mrf.mxu0
    %v149 = vadd.f32 %v52, %v148
    %v150 = vpop.f32.mrf.mxu0
    %151 = vmatprep.mubr.f32.mxu0 0.0
    %152 = vmatmul.mubr.f32.gmra.mxu0 %v70
    %v153 = vpop.f32.mrf.mxu0
    %v154 = vadd.f32 %v57, %v153
    %v155 = vpop.f32.mrf.mxu0
    %156 = vdwg.mxu0
    %v157 = vmax.f32 %v139, 0.0
    %v158 = vmax.f32 %v144, 0.0
    %v159 = vmax.f32 %v149, 0.0
    %v160 = vmax.f32 %v154, 0.0
    %v161 = vld [vmem:[%s2] sm:$0xff]
    %v162 = vld [vmem:[%s2 + $0x8] sm:$0xff]
    %v163 = vld [vmem:[%s2 + $0x10] sm:$0xff]
    %v164 = vld [vmem:[%s2 + $0x18] sm:$0xff]
    %v165 = vld [vmem:[%s5] sm:$0xff]
    %v166 = vld [vmem:[%s5 + $0x8] sm:$0xff]
    %v167 = vld [vmem:[%s5 + $0x10] sm:$0xff]
    %v168 = vld [vmem:[%s5 + $0x18] sm:$0xff]
    %170 = vset.pattern.permute.xlu0 0
    %171 = vperm.xlu0 %170, %v165
    %v172 = vpop.permute.xlu0 %171
    %175 = vset.pattern.permute.xlu0 0
    %176 = vperm.xlu0 %175, %v166
    %v177 = vpop.permute.xlu0 %176
    %180 = vset.pattern.permute.xlu0 0
    %181 = vperm.xlu0 %180, %v167
    %v182 = vpop.permute.xlu0 %181
    %185 = vset.pattern.permute.xlu0 0
    %186 = vperm.xlu0 %185, %v168
    %v187 = vpop.permute.xlu0 %186
    %vm189 = vcmask 261120
    %v191 = vsel %vm189, %v161, 0
    %v194 = vsel %vm189, %v162, 0
    %v197 = vsel %vm189, %v163, 0
    %v200 = vsel %vm189, %v164, 0
    %202 = vmatprep.subr.mxu0 0.0
    %203 = vmatpush1.msra.mxu0 0.0
    %204 = vmatprep.subr.mxu0 0.0
    %205 = vmatpush1.msra.mxu0 0.0
    %206 = vmatprep.subr.mxu0 0.0
    %207 = vmatpush1.msra.mxu0 0.0
    %208 = vmatprep.subr.mxu0 0.0
    %209 = vmatpush1.msra.mxu0 0.0
    %210 = vmatprep.subr.mxu0 0.0
    %211 = vmatpush1.msra.mxu0 0.0
    %212 = vmatprep.subr.mxu0 0.0
    %213 = vmatpush1.msra.mxu0 0.0
    %214 = vmatprep.subr.mxu0 0.0
    %215 = vmatpush1.msra.mxu0 0.0
    %216 = vmatprep.subr.mxu0 0.0
    %217 = vmatpush1.msra.mxu0 0.0
    %218 = vmatprep.subr.mxu0 0.0
    %219 = vmatpush1.msra.mxu0 0.0
    %220 = vmatprep.subr.mxu0 0.0
    %221 = vmatpush1.msra.mxu0 0.0
    %222 = vmatprep.subr.mxu0 0.0
    %223 = vmatpush1.msra.mxu0 0.0
    %224 = vmatprep.subr.mxu0 0.0
    %225 = vmatpush1.msra.mxu0 0.0
    %226 = vmatprep.subr.mxu0 0.0
    %227 = vmatpush1.msra.mxu0 %v160
    %228 = vmatprep.subr.mxu0 0.0
    %229 = vmatpush1.msra.mxu0 %v159
    %230 = vmatprep.subr.mxu0 0.0
    %231 = vmatpush1.msra.mxu0 %v158
    %232 = vmatprep.subr.mxu0 0.0
    %233 = vmatpush1.msra.mxu0 %v157
    %234 = vmatprep.subr.mxu0 0.0
    %235 = vmatpush2.msra.mxu0 0.0
    %236 = vmatprep.subr.mxu0 0.0
    %237 = vmatpush2.msra.mxu0 0.0
    %238 = vmatprep.subr.mxu0 0.0
    %239 = vmatpush2.msra.mxu0 0.0
    %240 = vmatprep.subr.mxu0 0.0
    %241 = vmatpush2.msra.mxu0 0.0
    %242 = vmatprep.subr.mxu0 0.0
    %243 = vmatpush2.msra.mxu0 0.0
    %244 = vmatprep.subr.mxu0 0.0
    %245 = vmatpush2.msra.mxu0 0.0
    %246 = vmatprep.subr.mxu0 0.0
    %247 = vmatpush2.msra.mxu0 0.0
    %248 = vmatprep.subr.mxu0 0.0
    %249 = vmatpush2.msra.mxu0 0.0
    %250 = vmatprep.subr.mxu0 0.0
    %251 = vmatpush2.msra.mxu0 0.0
    %252 = vmatprep.subr.mxu0 0.0
    %253 = vmatpush2.msra.mxu0 0.0
    %254 = vmatprep.subr.mxu0 0.0
    %255 = vmatpush2.msra.mxu0 0.0
    %256 = vmatprep.subr.mxu0 0.0
    %257 = vmatpush2.msra.mxu0 0.0
    %258 = vmatprep.subr.mxu0 0.0
    %259 = vmatpush2.msra.mxu0 0.0
    %260 = vmatprep.subr.mxu0 0.0
    %261 = vmatpush2.msra.mxu0 0.0
    %262 = vmatprep.subr.mxu0 0.0
    %263 = vmatpush2.msra.mxu0 0.0
    %264 = vmatprep.subr.mxu0 0.0
    %265 = vmatpush2.msra.mxu0 0.0
    %266 = vmatprep.mubr.f32.mxu0 0.0
    %267 = vmatmul.mubr.f32.gmra.mxu0 %v191
    %v268 = vpop.f32.mrf.mxu0
    %v269 = vadd.f32 %v172, %v268
    %v270 = vpop.f32.mrf.mxu0
    %271 = vmatprep.mubr.f32.mxu0 0.0
    %272 = vmatmul.mubr.f32.gmra.mxu0 %v194
    %v273 = vpop.f32.mrf.mxu0
    %v274 = vadd.f32 %v177, %v273
    %v275 = vpop.f32.mrf.mxu0
    %276 = vmatprep.mubr.f32.mxu0 0.0
    %277 = vmatmul.mubr.f32.gmra.mxu0 %v197
    %v278 = vpop.f32.mrf.mxu0
    %v279 = vadd.f32 %v182, %v278
    %v280 = vpop.f32.mrf.mxu0
    %281 = vmatprep.mubr.f32.mxu0 0.0
    %282 = vmatmul.mubr.f32.gmra.mxu0 %v200
    %v283 = vpop.f32.mrf.mxu0
    %v284 = vadd.f32 %v187, %v283
    %v285 = vpop.f32.mrf.mxu0
    %286 = vdwg.mxu0
    %v287 = vmax.f32 %v269, 0.0
    %v288 = vmax.f32 %v274, 0.0
    %v289 = vmax.f32 %v279, 0.0
    %v290 = vmax.f32 %v284, 0.0
    %v291 = vld [vmem:[%s3] sm:$0x1]
    %v292 = vld [vmem:[#allocation2] sm:$0x1]
    %294 = vset.pattern.permute.xlu0 0
    %295 = vperm.xlu0 %294, %v292
    %v296 = vpop.permute.xlu0 %295
    %v298 = vlaneseq
    %v299 = vshrl.u32 %v298, 7
    %v300 = vsub.s32 0, %v299
    %v301 = vrot.slane %v296, %v300
    %v303 = vsel %vm189, %v291, 0
    %305 = vmatprep.subr.mxu0 0.0
    %306 = vmatpush1.msra.mxu0 0.0
    %307 = vmatprep.subr.mxu0 0.0
    %308 = vmatpush1.msra.mxu0 0.0
    %309 = vmatprep.subr.mxu0 0.0
    %310 = vmatpush1.msra.mxu0 0.0
    %311 = vmatprep.subr.mxu0 0.0
    %312 = vmatpush1.msra.mxu0 0.0
    %313 = vmatprep.subr.mxu0 0.0
    %314 = vmatpush1.msra.mxu0 0.0
    %315 = vmatprep.subr.mxu0 0.0
    %316 = vmatpush1.msra.mxu0 0.0
    %317 = vmatprep.subr.mxu0 0.0
    %318 = vmatpush1.msra.mxu0 0.0
    %319 = vmatprep.subr.mxu0 0.0
    %320 = vmatpush1.msra.mxu0 0.0
    %321 = vmatprep.subr.mxu0 0.0
    %322 = vmatpush1.msra.mxu0 0.0
    %323 = vmatprep.subr.mxu0 0.0
    %324 = vmatpush1.msra.mxu0 0.0
    %325 = vmatprep.subr.mxu0 0.0
    %326 = vmatpush1.msra.mxu0 0.0
    %327 = vmatprep.subr.mxu0 0.0
    %328 = vmatpush1.msra.mxu0 0.0
    %329 = vmatprep.subr.mxu0 0.0
    %330 = vmatpush1.msra.mxu0 %v290
    %331 = vmatprep.subr.mxu0 0.0
    %332 = vmatpush1.msra.mxu0 %v289
    %333 = vmatprep.subr.mxu0 0.0
    %334 = vmatpush1.msra.mxu0 %v288
    %335 = vmatprep.subr.mxu0 0.0
    %336 = vmatpush1.msra.mxu0 %v287
    %337 = vmatprep.subr.mxu0 0.0
    %338 = vmatpush2.msra.mxu0 0.0
    %339 = vmatprep.subr.mxu0 0.0
    %340 = vmatpush2.msra.mxu0 0.0
    %341 = vmatprep.subr.mxu0 0.0
    %342 = vmatpush2.msra.mxu0 0.0
    %343 = vmatprep.subr.mxu0 0.0
    %344 = vmatpush2.msra.mxu0 0.0
    %345 = vmatprep.subr.mxu0 0.0
    %346 = vmatpush2.msra.mxu0 0.0
    %347 = vmatprep.subr.mxu0 0.0
    %348 = vmatpush2.msra.mxu0 0.0
    %349 = vmatprep.subr.mxu0 0.0
    %350 = vmatpush2.msra.mxu0 0.0
    %351 = vmatprep.subr.mxu0 0.0
    %352 = vmatpush2.msra.mxu0 0.0
    %353 = vmatprep.subr.mxu0 0.0
    %354 = vmatpush2.msra.mxu0 0.0
    %355 = vmatprep.subr.mxu0 0.0
    %356 = vmatpush2.msra.mxu0 0.0
    %357 = vmatprep.subr.mxu0 0.0
    %358 = vmatpush2.msra.mxu0 0.0
    %359 = vmatprep.subr.mxu0 0.0
    %360 = vmatpush2.msra.mxu0 0.0
    %361 = vmatprep.subr.mxu0 0.0
    %362 = vmatpush2.msra.mxu0 0.0
    %363 = vmatprep.subr.mxu0 0.0
    %364 = vmatpush2.msra.mxu0 0.0
    %365 = vmatprep.subr.mxu0 0.0
    %366 = vmatpush2.msra.mxu0 0.0
    %367 = vmatprep.subr.mxu0 0.0
    %368 = vmatpush2.msra.mxu0 0.0
    %369 = vmatprep.mubr.f32.mxu0 0.0
    %370 = vmatmul.mubr.f32.gmra.mxu0 %v303
    %v371 = vpop.f32.mrf.mxu0
    %v372 = vadd.f32 %v301, %v371
    %v373 = vpop.f32.mrf.mxu0
    %374 = vdwg.mxu0
    %vm375 = vcmask 8192
    %376 = vst.msk [vmem:[#allocation3] sm:$0x1] %vm375, %v372
    // Predicated region
    $region30: #{qnetwork_forward.1} parent=1 // pred_check
      _
    $region31: #{qnetwork_forward.1} parent=1 // pred_check_branch
      %378 = sbr.rel (0) target = $region33
    $region32: #{qnetwork_forward.1} parent=1 // pred_region
      %s380 = ssub.s32 16, 16
      %381 = vsyncadd [#allocation4], %s380
      %s383 = sshll.u32 [#allocation3], 4
      %s384 = int_to_ptr.vmem [resolvable:$true] %s383
      %386 = dma.vmem_to_hbm [thread:$0]  %s384, 16, %s7, [#allocation4]
    $region33: #{qnetwork_forward.1} parent=1 // pred_fallthru
      _
    // Predicated region
    $region34: #{qnetwork_forward.1} parent=1 // pred_check
      _
    $region35: #{qnetwork_forward.1} parent=1 // pred_check_branch
      %388 = sbr.rel (0) target = $region37
    $region36: #{qnetwork_forward.1} parent=1 // pred_region
      %389 = dma.done [#allocation4], 16
    $region37: #{qnetwork_forward.1} parent=1 // pred_fallthru
      _
    %390 = vsyncpa [#allocation4], 1

</llo_original>
